<compile_context>
chip_gen: v6e
topology: v6e:2x2x1
jax: 0.10.0
libtpu: 0.0.40
codegen_flags: <defaults>
</compile_context>

<pallas_src>
import functools

import jax
import jax.numpy as jnp
from jax import lax
from jax.experimental import pallas as pl
from jax.experimental.pallas import tpu as pltpu

EPS = 1e-5
_MIB = 1024 * 1024


# ---------------------------------------------------------------------------
# Helpers
# ---------------------------------------------------------------------------
def _fold_bn_into_weight(w, conv_bias, gamma, beta, mean, var):
    """(x*w + b - mean)*g/sqrt(v+eps) + beta  ==  x*(w*scale) + offset."""
    scale = gamma / jnp.sqrt(var + EPS)
    w_folded = w * scale.reshape((-1,) + (1,) * (w.ndim - 1))
    offset = (conv_bias - mean) * scale + beta
    return w_folded, offset


def _vmem_limit(estimate_bytes):
    """Explicit scoped-VMEM limit: >= the per-chip defaults, <= v7x physical."""
    return int(min(64 * _MIB, max(32 * _MIB, 3 * estimate_bytes)))


def _pick_hw_tile(hw, max_tile):
    """Lane tile for the 1x1-conv kernel: the full extent if it already fits,
    else the largest multiple of 128 <= max_tile dividing hw, else a fixed
    max_tile with a ragged (masked) tail block."""
    max_tile = max(128, (max_tile // 128) * 128)
    if hw <= max_tile:
        return hw
    best = 0
    for t in range(max_tile, 127, -128):
        if hw % t == 0:
            best = t
            break
    # A >=512-lane tile runs near the HBM roofline; a degenerate 128/256-lane
    # divisor (or none) is better served by a fixed tile + masked tail.
    return best if best >= 512 else max_tile


def _pick_conv_row_tile(H, W, Cin, Cout, in_bytes, out_bytes, budget, max_rows):
    """Row tile TH for the 3x3 conv: divisor of H, 2 <= TH <= H-4 (so only the
    first/last tiles need boundary handling), TH*W a multiple of 128, and the
    double-buffered window + output within the VMEM budget.  None -> fallback."""
    cands = [d for d in range(2, H - 3)
             if H % d == 0 and (d * W) % 128 == 0
             and (max_rows is None or d <= max_rows)]
    if not cands:
        return None

    def vmem(d):
        return 2 * Cin * (d + 4) * W * in_bytes + 2 * Cout * d * W * out_bytes

    fitting = [d for d in cands if vmem(d) <= budget]
    return max(fitting) if fitting else min(cands)


# ---------------------------------------------------------------------------
# Pallas kernels
# ---------------------------------------------------------------------------
def _att_kernel(x_ref, w1_ref, o1_ref, w2_ref, o2_ref, out_ref):
    """Fused W1@x + o1 -> ReLU -> W2@(.) + o2 -> Sigmoid.

    Channels on sublanes, H*W on lanes; BN already folded into W*/o*.
    The block carries `nb` batch images (leading axis) so tiny-channel configs
    amortize the per-grid-step cost.
    """
    nb = x_ref.shape[0]
    for i in range(nb):                                       # small static unroll
        x = x_ref[i]                                          # (C0, thw)
        h = jnp.dot(w1_ref[...], x, preferred_element_type=jnp.float32)
        h = jnp.maximum(h + o1_ref[...], 0.0)                 # (C1, thw) f32
        y = jnp.dot(w2_ref[...], h.astype(w2_ref.dtype),
                    preferred_element_type=jnp.float32)
        out_ref[i] = jax.nn.sigmoid(y + o2_ref[...]).astype(out_ref.dtype)
    # TODO(synk): for large C1 and wide lane tiles, sub-tile the lane axis so
    # the f32 hidden stays in a bounded footprint (v7x spill guard).


def _conv3x3_kernel(x_hbm, w_ref, o_ref, out_ref, xwin, sem,
                    *, H, W, TH, nj, apply_halo):
    """3x3 conv (pad=1) + folded BN + ReLU for one (image, row-tile) grid cell.

    x_hbm : (N, Cin, src_hw) HBM ref (ANY); src_hw = H*W (halo mode) or
            (H+4)*W (pre-padded fallback, apply_halo=False).
    w_ref : (9, Cout, Cin) BN-folded weights, tap index k = 3*dy + dx.
    o_ref : (Cout, 1) folded bias/BN offset.
    xwin  : VMEM (2, Cin, (TH+4)*W) manual double buffer — the halo'd window
            covering image rows [h0-2, h0+TH+2) of the current row tile.
    Output rows of this step: [j*TH, (j+1)*TH).
    """
    n = pl.program_id(0)
    j = pl.program_id(1)
    HW = H * W
    thw = TH * W
    Lw = (TH + 4) * W
    Cout = w_ref.shape[1]

    def window_start(jj):
        if apply_halo:
            # Clamp so the DMA never leaves the image; the first/last tiles are
            # re-aligned below with an in-VMEM roll.
            return jnp.clip(jj * thw - 2 * W, 0, HW - Lw)
        return jj * thw                                   # pre-padded source

    def start_fetch(jj, slot):
        pltpu.make_async_copy(
            x_hbm.at[n, :, pl.ds(window_start(jj), Lw)],
            xwin.at[slot], sem.at[slot]).start()

    slot = j % 2
    # The first row tile of each image fetches its own window, so the manual
    # pipeline never crosses the (megacore-parallel) batch axis.
    @pl.when(j == 0)
    def _():
        start_fetch(0, 0)

    # Prefetch the next row tile's window while computing this one.
    if nj > 1:
        @pl.when(j + 1 < nj)
        def _():
            start_fetch(j + 1, 1 - slot)

    # Wait for this tile's window.
    pltpu.make_async_copy(
        x_hbm.at[n, :, pl.ds(0, Lw)], xwin.at[slot], sem.at[slot]).wait()

    if apply_halo:
        # Boundary tiles were clamped by +-2 rows: rotate back to the canonical
        # [h0-2, h0+TH+2) alignment.  The 2W wrapped lanes are only ever read
        # by taps that the boundary masks below zero out.
        @pl.when(j == 0)                              # slot is 0 when j == 0
        def _():
            xwin[0] = jnp.roll(xwin[0], 2 * W, axis=1)

        last_slot = (nj - 1) % 2
        @pl.when(j == nj - 1)
        def _():
            xwin[last_slot] = jnp.roll(xwin[last_slot], -2 * W, axis=1)

    x = xwin[slot]                                            # (Cin, Lw)
    dt = x.dtype

    # In-kernel 0/1 masks (cheap VPU work, no HBM mask arrays).
    lane = lax.broadcasted_iota(jnp.int32, (1, thw), 1)
    col = lane % W
    mask_l = (col > 0).astype(dt)                 # kills wrapped column, dx=0
    mask_r = (col < W - 1).astype(dt)             # kills wrapped column, dx=2
    if apply_halo:
        row = lane // W
        mask_t = jnp.logical_or(row > 0, j > 0).astype(dt)          # image row -1
        mask_b = jnp.logical_or(row < TH - 1, j < nj - 1).astype(dt)  # image row H

    # TODO(synk): on v5e, stacking the 9 tap slices into one (9*Cin, thw)
    # operand and doing a single K=9*Cin matmul would cut MRF drain passes.
    acc = jnp.zeros((Cout, thw), jnp.float32)
    for dy in range(3):
        for dx in range(3):
            off = (dy + 1) * W + dx - 1                   # >= W-1, static
            xs = x[:, off:off + thw]                      # contiguous lane slice
            m = None
            if dx == 0:
                m = mask_l
            elif dx == 2:
                m = mask_r
            if apply_halo and dy == 0:
                m = mask_t if m is None else m * mask_t
            if apply_halo and dy == 2:
                m = mask_b if m is None else m * mask_b
            if m is not None:
                xs = xs * m
            acc = acc + jnp.dot(w_ref[3 * dy + dx], xs,
                                preferred_element_type=jnp.float32)
    out_ref[0] = jnp.maximum(acc + o_ref[...], 0.0).astype(out_ref.dtype)


# ---------------------------------------------------------------------------
# Wrappers
# ---------------------------------------------------------------------------
def att_layer_forward(x_nchw, params, *, out_dtype=None, max_hw_tile=2048,
                      max_batch_block=8, vmem_budget_bytes=8 * _MIB):
    """att_layer: Conv1x1 -> BN -> ReLU -> Conv1x1 -> BN -> Sigmoid (NCHW)."""
    (w1, b1, g1, be1, m1, v1, w2, b2, g2, be2, m2, v2) = params
    N, C0, H, W = x_nchw.shape
    C1, C2 = w1.shape[0], w2.shape[0]
    HW = H * W
    cdt = x_nchw.dtype                            # compute dtype follows input
    odt = jnp.dtype(out_dtype) if out_dtype is not None else jnp.dtype(cdt)
    in_b = jnp.dtype(cdt).itemsize
    out_b = odt.itemsize

    # Pack several images per grid step when channels are tiny (dead sublanes
    # and the ~0.35us/step overhead dominate otherwise).
    nb = 1
    if max(C0, C1, C2) <= 16 and N > 1:
        nb = min(N, max_batch_block)
        while N % nb:
            nb -= 1

    per_lane = nb * (2 * C0 * in_b + 2 * C2 * out_b + 4 * C1)
    budget_tile = max(128, (vmem_budget_bytes // per_lane) // 128 * 128)
    thw = _pick_hw_tile(HW, min(max_hw_tile, budget_tile))
    grid = (N // nb, pl.cdiv(HW, thw))

    # Free reshape (no transpose): channels -> sublanes, H*W -> lanes; the
    # activation keeps its own dtype (no wrapper-side cast pass).
    x3 = x_nchw.reshape(N, C0, HW)

    w1f, o1 = _fold_bn_into_weight(w1, b1, g1, be1, m1, v1)
    w2f, o2 = _fold_bn_into_weight(w2, b2, g2, be2, m2, v2)
    w1f = w1f.astype(cdt)                          # (C1, C0)
    w2f = w2f.astype(cdt)                          # (C2, C1)
    o1 = o1[:, None].astype(jnp.float32)           # (C1, 1)
    o2 = o2[:, None].astype(jnp.float32)           # (C2, 1)

    est = per_lane * thw + 2 * (C1 * C0 + C2 * C1) * in_b
    out3 = pl.pallas_call(
        _att_kernel,
        out_shape=jax.ShapeDtypeStruct((N, C2, HW), odt),
        grid_spec=pltpu.PrefetchScalarGridSpec(
            num_scalar_prefetch=0,
            grid=grid,
            in_specs=[
                pl.BlockSpec((nb, C0, thw), lambda i, j: (i, 0, j)),
                pl.BlockSpec((C1, C0), lambda i, j: (0, 0)),
                pl.BlockSpec((C1, 1), lambda i, j: (0, 0)),
                pl.BlockSpec((C2, C1), lambda i, j: (0, 0)),
                pl.BlockSpec((C2, 1), lambda i, j: (0, 0)),
            ],
            out_specs=pl.BlockSpec((nb, C2, thw), lambda i, j: (i, 0, j)),
        ),
        compiler_params=pltpu.CompilerParams(
            dimension_semantics=("parallel", "parallel"),
            vmem_limit_bytes=_vmem_limit(est)),
    )(x3, w1f, o1, w2f, o2)

    return out3.reshape(N, C2, H, W)


def conv_layer_forward(x_nchw, params, *, out_dtype=None,
                       vmem_budget_bytes=8 * _MIB, max_rows_per_tile=None):
    """conv_layer (pred=False): Conv3x3(pad=1) -> BN -> ReLU, NCHW in/out."""
    w, b, g, be, m, v = params                     # w: [Cout, Cin, 3, 3]
    N, Cin, H, W = x_nchw.shape
    Cout = w.shape[0]
    HW = H * W
    cdt = x_nchw.dtype
    odt = jnp.dtype(out_dtype) if out_dtype is not None else jnp.dtype(cdt)

    wf, o = _fold_bn_into_weight(w, b, g, be, m, v)
    # Tap-major layout matching k = 3*dy + dx in the kernel.
    w_r = jnp.transpose(wf, (2, 3, 0, 1)).reshape(9, Cout, Cin).astype(cdt)
    o = o[:, None].astype(jnp.float32)             # (Cout, 1)

    TH = _pick_conv_row_tile(H, W, Cin, Cout, jnp.dtype(cdt).itemsize,
                             odt.itemsize, vmem_budget_bytes, max_rows_per_tile)
    if TH is None:
        # TODO(synk): shapes with no row tile satisfying TH*W % 128 == 0 (or
        # tiny H) still pay one padded-plane pass in HBM; the main path below
        # removes it via halo masking.
        x_src = jnp.pad(x_nchw, ((0, 0), (0, 0), (2, 2), (0, 0)))
        x_src = x_src.reshape(N, Cin, (H + 4) * W)
        TH, nj, halo = H, 1, False
    else:
        x_src = x_nchw.reshape(N, Cin, HW)         # free reshape, no pad pass
        nj, halo = H // TH, True

    Lw = (TH + 4) * W
    est = (2 * Cin * Lw * jnp.dtype(cdt).itemsize
           + 2 * Cout * TH * W * odt.itemsize
           + 2 * 9 * Cout * Cin * jnp.dtype(cdt).itemsize)

    kernel = functools.partial(_conv3x3_kernel, H=H, W=W, TH=TH, nj=nj,
                               apply_halo=halo)
    out3 = pl.pallas_call(
        kernel,
        out_shape=jax.ShapeDtypeStruct((N, Cout, HW), odt),
        grid_spec=pltpu.PrefetchScalarGridSpec(
            num_scalar_prefetch=0,
            grid=(N, nj),
            in_specs=[
                pl.BlockSpec(memory_space=pl.ANY),          # x: manual halo DMA
                pl.BlockSpec((9, Cout, Cin), lambda n, j: (0, 0, 0)),
                pl.BlockSpec((Cout, 1), lambda n, j: (0, 0)),
            ],
            out_specs=pl.BlockSpec((1, Cout, TH * W), lambda n, j: (n, 0, j)),
            scratch_shapes=[
                pltpu.VMEM((2, Cin, Lw), cdt),              # window double buffer
                pltpu.SemaphoreType.DMA((2,)),
            ]),
        compiler_params=pltpu.CompilerParams(
            # Batch axis may be sharded across TensorCores; the manual halo
            # pipeline runs sequentially along the row-tile axis of each image.
            dimension_semantics=("parallel", "arbitrary"),
            vmem_limit_bytes=_vmem_limit(est)),
    )(x_src, w_r, o)

    return out3.reshape(N, Cout, H, W)


# ---------------------------------------------------------------------------
# Pure-JAX references (correctness check)
# ---------------------------------------------------------------------------
def _bn_ref(x, g, be, m, v):
    return (x - m[None, :, None, None]) / jnp.sqrt(v[None, :, None, None] + EPS) \
        * g[None, :, None, None] + be[None, :, None, None]


def att_layer_ref(x, params):
    w1, b1, g1, be1, m1, v1, w2, b2, g2, be2, m2, v2 = params
    h = jnp.einsum("nchw,oc->nohw", x, w1) + b1[None, :, None, None]
    h = jnp.maximum(_bn_ref(h, g1, be1, m1, v1), 0.0)
    y = jnp.einsum("nchw,oc->nohw", h, w2) + b2[None, :, None, None]
    return jax.nn.sigmoid(_bn_ref(y, g2, be2, m2, v2))


def conv_layer_ref(x, params):
    w, b, g, be, m, v = params
    y = lax.conv_general_dilated(x, w, (1, 1), ((1, 1), (1, 1)),
                                 dimension_numbers=("NCHW", "OIHW", "NCHW"))
    y = y + b[None, :, None, None]
    return jnp.maximum(_bn_ref(y, g, be, m, v), 0.0)


# ---------------------------------------------------------------------------
if __name__ == "__main__":
    key = jax.random.PRNGKey(0)
    keys = jax.random.split(key, 16)

    N, H, W = 2, 16, 16
    att_channel = (4, 8, 4)     # [in, hidden, out] for att_layer
    conv_channel = (4, 8)       # [in, out]         for conv_layer

    x = jax.random.normal(keys[0], (N, att_channel[0], H, W), jnp.float32)

    def bn_params(k, c):
        k1, k2, k3, k4 = jax.random.split(k, 4)
        gamma = 1.0 + 0.1 * jax.random.normal(k1, (c,), jnp.float32)
        beta = 0.1 * jax.random.normal(k2, (c,), jnp.float32)
        mean = 0.1 * jax.random.normal(k3, (c,), jnp.float32)
        var = 0.5 + jax.random.uniform(k4, (c,), jnp.float32)
        return gamma, beta, mean, var

    c0, c1, c2 = att_channel
    w1 = 0.3 * jax.random.normal(keys[1], (c1, c0), jnp.float32)
    b1 = 0.1 * jax.random.normal(keys[2], (c1,), jnp.float32)
    w2 = 0.3 * jax.random.normal(keys[3], (c2, c1), jnp.float32)
    b2 = 0.1 * jax.random.normal(keys[4], (c2,), jnp.float32)
    att_params = (w1, b1, *bn_params(keys[5], c1), w2, b2, *bn_params(keys[6], c2))

    ci, co = conv_channel
    w3 = 0.2 * jax.random.normal(keys[7], (co, ci, 3, 3), jnp.float32)
    b3 = 0.1 * jax.random.normal(keys[8], (co,), jnp.float32)
    conv_params = (w3, b3, *bn_params(keys[9], co))

    # TODO(synk): AttentionBlock.forward() raises ValueError in the superclass
    # (abstract); here we run the two building blocks it defines.
    att_out = jax.block_until_ready(att_layer_forward(x, att_params))
    conv_out = jax.block_until_ready(conv_layer_forward(x, conv_params))

    att_exp = att_layer_ref(x, att_params)
    conv_exp = conv_layer_ref(x, conv_params)
    assert att_out.shape == (N, c2, H, W)
    assert conv_out.shape == (N, co, H, W)
    assert jnp.allclose(att_out, att_exp, atol=1e-3, rtol=1e-3)
    assert jnp.allclose(conv_out, conv_exp, atol=1e-3, rtol=1e-3)

    # Taller feature map with a small row-tile cap: exercises interior row
    # tiles (j = 1, 2) of the halo'd conv pipeline as well as both edge tiles.
    x_tall = jax.random.normal(keys[10], (N, ci, 32, W), jnp.float32)
    conv_tall = jax.block_until_ready(
        conv_layer_forward(x_tall, conv_params, max_rows_per_tile=8))
    assert jnp.allclose(conv_tall, conv_layer_ref(x_tall, conv_params),
                        atol=1e-3, rtol=1e-3)

    # bf16 producer path: bf16 activations in, bf16 out (half the HBM traffic),
    # f32 accumulate + epilogue inside the kernels.
    x_bf = x.astype(jnp.bfloat16)
    att_bf = jax.block_until_ready(
        att_layer_forward(x_bf, att_params, out_dtype=jnp.bfloat16))
    conv_bf = jax.block_until_ready(
        conv_layer_forward(x_bf, conv_params, out_dtype=jnp.bfloat16))
    assert att_bf.dtype == jnp.bfloat16 and conv_bf.dtype == jnp.bfloat16
    assert jnp.allclose(att_bf.astype(jnp.float32), att_exp, atol=5e-2, rtol=5e-2)
    assert jnp.allclose(conv_bf.astype(jnp.float32), conv_exp, atol=5e-2, rtol=5e-2)

    print("KERNEL_OK")
</pallas_src>

<mosaic_0001>
module attributes {stable_mosaic.version = 11 : i64} {
  func.func @_att_kernel(%arg0: i32, %arg1: i32, %arg2: memref<2x4x256xf32, #tpu.memory_space<vmem>>, %arg3: memref<8x4xf32, #tpu.memory_space<vmem>>, %arg4: memref<8x1xf32, #tpu.memory_space<vmem>>, %arg5: memref<4x8xf32, #tpu.memory_space<vmem>>, %arg6: memref<4x1xf32, #tpu.memory_space<vmem>>, %arg7: memref<2x4x256xf32, #tpu.memory_space<vmem>>) attributes {dimension_semantics = [#tpu.dimension_semantics<parallel>, #tpu.dimension_semantics<parallel>], iteration_bounds = array<i64: 1, 1>, scalar_prefetch = 0 : i64, scratch_operands = 0 : i64, tpu.core_type = #tpu.core_type<tc>, window_params = [{transform_indices = @transform_0, window_bounds = array<i64: 2, 4, 256>}, {pipeline_mode = #tpu.pipeline_mode<synchronous>, transform_indices = @transform_1, window_bounds = array<i64: 8, 4>}, {pipeline_mode = #tpu.pipeline_mode<synchronous>, transform_indices = @transform_2, window_bounds = array<i64: 8, 1>}, {pipeline_mode = #tpu.pipeline_mode<synchronous>, transform_indices = @transform_3, window_bounds = array<i64: 4, 8>}, {pipeline_mode = #tpu.pipeline_mode<synchronous>, transform_indices = @transform_4, window_bounds = array<i64: 4, 1>}, {transform_indices = @transform_5, window_bounds = array<i64: 2, 4, 256>}]} {
    %c0 = arith.constant 0 : index
    %c0_0 = arith.constant 0 : index
    %c0_1 = arith.constant 0 : index
    %0 = vector.load %arg2[%c0, %c0_0, %c0_1] : memref<2x4x256xf32, #tpu.memory_space<vmem>>, vector<1x4x256xf32>
    %1 = vector.shape_cast %0 : vector<1x4x256xf32> to vector<4x256xf32>
    %c0_2 = arith.constant 0 : index
    %c0_3 = arith.constant 0 : index
    %2 = vector.load %arg3[%c0_2, %c0_3] : memref<8x4xf32, #tpu.memory_space<vmem>>, vector<8x4xf32>
    %cst = arith.constant dense<0.000000e+00> : vector<8x256xf32>
    %3 = tpu.matmul %2, %1, %cst {dimension_numbers = #tpu.dot_dimension_numbers<[1], [0], [0], [1], [0, 0, 1, 1], [], []>} : vector<8x4xf32>, vector<4x256xf32>, vector<8x256xf32> -> vector<8x256xf32>
    %c0_4 = arith.constant 0 : index
    %c0_5 = arith.constant 0 : index
    %4 = vector.load %arg4[%c0_4, %c0_5] : memref<8x1xf32, #tpu.memory_space<vmem>>, vector<8x1xf32>
    %5 = vector.broadcast %4 : vector<8x1xf32> to vector<8x256xf32>
    %6 = arith.addf %3, %5 : vector<8x256xf32>
    %cst_6 = arith.constant 0.000000e+00 : f32
    %7 = vector.broadcast %cst_6 : f32 to vector<8x256xf32>
    %8 = arith.maximumf %6, %7 : vector<8x256xf32>
    %c0_7 = arith.constant 0 : index
    %c0_8 = arith.constant 0 : index
    %9 = vector.load %arg5[%c0_7, %c0_8] : memref<4x8xf32, #tpu.memory_space<vmem>>, vector<4x8xf32>
    %cst_9 = arith.constant dense<0.000000e+00> : vector<4x256xf32>
    %10 = tpu.matmul %9, %8, %cst_9 {dimension_numbers = #tpu.dot_dimension_numbers<[1], [0], [0], [1], [0, 0, 1, 1], [], []>} : vector<4x8xf32>, vector<8x256xf32>, vector<4x256xf32> -> vector<4x256xf32>
    %c0_10 = arith.constant 0 : index
    %c0_11 = arith.constant 0 : index
    %11 = vector.load %arg6[%c0_10, %c0_11] : memref<4x1xf32, #tpu.memory_space<vmem>>, vector<4x1xf32>
    %12 = vector.broadcast %11 : vector<4x1xf32> to vector<4x256xf32>
    %13 = arith.addf %10, %12 : vector<4x256xf32>
    %14 = arith.negf %13 : vector<4x256xf32>
    %15 = math.exp %14 : vector<4x256xf32>
    %cst_12 = arith.constant 1.000000e+00 : f32
    %16 = vector.broadcast %cst_12 : f32 to vector<4x256xf32>
    %17 = arith.addf %16, %15 : vector<4x256xf32>
    %18 = arith.divf %16, %17 : vector<4x256xf32>
    %c0_13 = arith.constant 0 : index
    %c0_14 = arith.constant 0 : index
    %c0_15 = arith.constant 0 : index
    %19 = vector.load %arg7[%c0_13, %c0_14, %c0_15] : memref<2x4x256xf32, #tpu.memory_space<vmem>>, vector<1x4x256xf32>
    %20 = vector.shape_cast %19 : vector<1x4x256xf32> to vector<4x256xf32>
    %21 = vector.shape_cast %18 : vector<4x256xf32> to vector<1x4x256xf32>
    tpu.vector_store %arg7[%c0_13, %c0_14, %c0_15], %21 {strides = array<i32>} : memref<2x4x256xf32, #tpu.memory_space<vmem>>, vector<1x4x256xf32>,
    %c1 = arith.constant 1 : index
    %c0_16 = arith.constant 0 : index
    %c0_17 = arith.constant 0 : index
    %22 = vector.load %arg2[%c1, %c0_16, %c0_17] : memref<2x4x256xf32, #tpu.memory_space<vmem>>, vector<1x4x256xf32>
    %23 = vector.shape_cast %22 : vector<1x4x256xf32> to vector<4x256xf32>
    %c0_18 = arith.constant 0 : index
    %c0_19 = arith.constant 0 : index
    %24 = vector.load %arg3[%c0_18, %c0_19] : memref<8x4xf32, #tpu.memory_space<vmem>>, vector<8x4xf32>
    %cst_20 = arith.constant dense<0.000000e+00> : vector<8x256xf32>
    %25 = tpu.matmul %24, %23, %cst_20 {dimension_numbers = #tpu.dot_dimension_numbers<[1], [0], [0], [1], [0, 0, 1, 1], [], []>} : vector<8x4xf32>, vector<4x256xf32>, vector<8x256xf32> -> vector<8x256xf32>
    %c0_21 = arith.constant 0 : index
    %c0_22 = arith.constant 0 : index
    %26 = vector.load %arg4[%c0_21, %c0_22] : memref<8x1xf32, #tpu.memory_space<vmem>>, vector<8x1xf32>
    %27 = vector.broadcast %26 : vector<8x1xf32> to vector<8x256xf32>
    %28 = arith.addf %25, %27 : vector<8x256xf32>
    %cst_23 = arith.constant 0.000000e+00 : f32
    %29 = vector.broadcast %cst_23 : f32 to vector<8x256xf32>
    %30 = arith.maximumf %28, %29 : vector<8x256xf32>
    %c0_24 = arith.constant 0 : index
    %c0_25 = arith.constant 0 : index
    %31 = vector.load %arg5[%c0_24, %c0_25] : memref<4x8xf32, #tpu.memory_space<vmem>>, vector<4x8xf32>
    %cst_26 = arith.constant dense<0.000000e+00> : vector<4x256xf32>
    %32 = tpu.matmul %31, %30, %cst_26 {dimension_numbers = #tpu.dot_dimension_numbers<[1], [0], [0], [1], [0, 0, 1, 1], [], []>} : vector<4x8xf32>, vector<8x256xf32>, vector<4x256xf32> -> vector<4x256xf32>
    %c0_27 = arith.constant 0 : index
    %c0_28 = arith.constant 0 : index
    %33 = vector.load %arg6[%c0_27, %c0_28] : memref<4x1xf32, #tpu.memory_space<vmem>>, vector<4x1xf32>
    %34 = vector.broadcast %33 : vector<4x1xf32> to vector<4x256xf32>
    %35 = arith.addf %32, %34 : vector<4x256xf32>
    %36 = arith.negf %35 : vector<4x256xf32>
    %37 = math.exp %36 : vector<4x256xf32>
    %cst_29 = arith.constant 1.000000e+00 : f32
    %38 = vector.broadcast %cst_29 : f32 to vector<4x256xf32>
    %39 = arith.addf %38, %37 : vector<4x256xf32>
    %40 = arith.divf %38, %39 : vector<4x256xf32>
    %c1_30 = arith.constant 1 : index
    %c0_31 = arith.constant 0 : index
    %c0_32 = arith.constant 0 : index
    %41 = vector.load %arg7[%c1_30, %c0_31, %c0_32] : memref<2x4x256xf32, #tpu.memory_space<vmem>>, vector<1x4x256xf32>
    %42 = vector.shape_cast %41 : vector<1x4x256xf32> to vector<4x256xf32>
    %43 = vector.shape_cast %40 : vector<4x256xf32> to vector<1x4x256xf32>
    tpu.vector_store %arg7[%c1_30, %c0_31, %c0_32], %43 {strides = array<i32>} : memref<2x4x256xf32, #tpu.memory_space<vmem>>, vector<1x4x256xf32>,
    return
  }
  func.func @transform_0(%arg0: i32, %arg1: i32) -> (i32, i32, i32) {
    %c0_i32 = arith.constant 0 : i32
    %c0_i32_0 = arith.constant 0 : i32
    return %arg0, %c0_i32, %arg1 : i32, i32, i32
  }
  func.func @transform_1(%arg0: i32, %arg1: i32) -> (i32, i32) {
    %c0_i32 = arith.constant 0 : i32
    %c0_i32_0 = arith.constant 0 : i32
    %c0_i32_1 = arith.constant 0 : i32
    return %c0_i32, %c0_i32_0 : i32, i32
  }
  func.func @transform_2(%arg0: i32, %arg1: i32) -> (i32, i32) {
    %c0_i32 = arith.constant 0 : i32
    %c0_i32_0 = arith.constant 0 : i32
    %c0_i32_1 = arith.constant 0 : i32
    return %c0_i32, %c0_i32_0 : i32, i32
  }
  func.func @transform_3(%arg0: i32, %arg1: i32) -> (i32, i32) {
    %c0_i32 = arith.constant 0 : i32
    %c0_i32_0 = arith.constant 0 : i32
    %c0_i32_1 = arith.constant 0 : i32
    return %c0_i32, %c0_i32_0 : i32, i32
  }
  func.func @transform_4(%arg0: i32, %arg1: i32) -> (i32, i32) {
    %c0_i32 = arith.constant 0 : i32
    %c0_i32_0 = arith.constant 0 : i32
    %c0_i32_1 = arith.constant 0 : i32
    return %c0_i32, %c0_i32_0 : i32, i32
  }
  func.func @transform_5(%arg0: i32, %arg1: i32) -> (i32, i32, i32) {
    %c0_i32 = arith.constant 0 : i32
    %c0_i32_0 = arith.constant 0 : i32
    return %arg0, %c0_i32, %arg1 : i32, i32, i32
  }
}

</mosaic_0001>

<llo_original>
// kernel: tpu_custom_call.1
$region0: #{tpu_custom_call.1}
  #allocation0 [shape = 'u32[]', space=smem, size = 0x4, offset = 0x4, fixed_abs, tag = 'smem constant byte address 0x4 - core index']
  #allocation1 [shape = 'u32[144,128]{1,0:T(1,128)}', space=vmem, size = 0x12000, scoped, tag = 'internal scratch']
  %s0 = inlined_call_operand.vmem [shape: f32[2,4,256], index: 0, kind: input, shape index: {}]
  %s1 = inlined_call_operand.vmem [shape: f32[8,4], index: 1, kind: input, shape index: {}]
  %s2 = inlined_call_operand.vmem [shape: f32[8,1], index: 2, kind: input, shape index: {}]
  %s3 = inlined_call_operand.vmem [shape: f32[4,8], index: 3, kind: input, shape index: {}]
  %s4 = inlined_call_operand.vmem [shape: f32[4,1], index: 4, kind: input, shape index: {}]
  %s5 = inlined_call_operand.hbm [shape: f32[2,4,256], index: 5, kind: output, shape index: {}]
  %s6 = sld [smem:[#allocation0]]
  $region30: #{tpu_custom_call.1} parent=0
    _
  %s8 = ssub.s32 1, %s6
  %s9 = scalar_select 0, %s8, %s6
  $region1: #{tpu_custom_call.1} parent=0
    #allocation2 [shape = 'u8[8192]{0}', space=vmem, size = 0x2000, scoped, tag = 'output window, operand 0, single buffered']
    #allocation3 [shape = 's32[1]{0}', space=sflag, size = 0x4, scoped, tag = 'scoped memory for tpu_custom_call.1']
    %10 = vsyncpa [#allocation3], 0
    // Predicated region
    $region2: #{tpu_custom_call.1} parent=1 // pred_check
      _
    $region3: #{tpu_custom_call.1} parent=1 // pred_check_branch
      %12 = sbr.rel (0) target = $region5
    $region4: #{tpu_custom_call.1} parent=1 // pred_region
      _
    $region5: #{tpu_custom_call.1} parent=1 // pred_fallthru
      _
    // Predicated region
    $region6: #{tpu_custom_call.1} parent=1 // pred_check
      _
    $region7: #{tpu_custom_call.1} parent=1 // pred_check_branch
      %14 = sbr.rel (0) target = $region9
    $region8: #{tpu_custom_call.1} parent=1 // pred_region
      _
    $region9: #{tpu_custom_call.1} parent=1 // pred_fallthru
      _
    // Predicated region
    $region10: #{tpu_custom_call.1} parent=1 // pred_check
      _
    $region11: #{tpu_custom_call.1} parent=1 // pred_check_branch
      %16 = sbr.rel (0) target = $region13
    $region12: #{tpu_custom_call.1} parent=1 // pred_region
      _
    $region13: #{tpu_custom_call.1} parent=1 // pred_fallthru
      _
    // Predicated region
    $region14: #{tpu_custom_call.1} parent=1 // pred_check
      _
    $region15: #{tpu_custom_call.1} parent=1 // pred_check_branch
      %18 = sbr.rel (0) target = $region17
    $region16: #{tpu_custom_call.1} parent=1 // pred_region
      _
    $region17: #{tpu_custom_call.1} parent=1 // pred_fallthru
      _
    // Predicated region
    $region18: #{tpu_custom_call.1} parent=1 // pred_check
      _
    $region19: #{tpu_custom_call.1} parent=1 // pred_check_branch
      %20 = sbr.rel (0) target = $region21
    $region20: #{tpu_custom_call.1} parent=1 // pred_region
      _
    $region21: #{tpu_custom_call.1} parent=1 // pred_fallthru
      _
    %v21 = vld [vmem:[%s0] sm:$0xff]
    %v22 = vld [vmem:[%s1] sm:$0xff]
    %v23 = vld [vmem:[%s2] sm:$0xff]
    %25 = vset.pattern.permute.xlu0 0
    %26 = vperm.xlu0 %25, %v23
    %v27 = vpop.permute.xlu0 %26
    %v30 = vcombine.high %v21, %v21
    %vm31 = vcmask 31744
    %v33 = vsel %vm31, %v22, 0
    %vm35 = vcmask 1043456
    %v36 = vsel %vm35, %v21, 0
    %v38 = vsel %vm35, %v30, 0
    %40 = vmatprep.subr.mxu0 0.0
    %41 = vmatpush1.msra.mxu0 0.0
    %42 = vmatprep.subr.mxu0 0.0
    %43 = vmatpush1.msra.mxu0 0.0
    %44 = vmatprep.subr.mxu0 0.0
    %45 = vmatpush1.msra.mxu0 0.0
    %46 = vmatprep.subr.mxu0 0.0
    %47 = vmatpush1.msra.mxu0 0.0
    %48 = vmatprep.subr.mxu0 0.0
    %49 = vmatpush1.msra.mxu0 0.0
    %50 = vmatprep.subr.mxu0 0.0
    %51 = vmatpush1.msra.mxu0 0.0
    %52 = vmatprep.subr.mxu0 0.0
    %53 = vmatpush1.msra.mxu0 0.0
    %54 = vmatprep.subr.mxu0 0.0
    %55 = vmatpush1.msra.mxu0 0.0
    %56 = vmatprep.subr.mxu0 0.0
    %57 = vmatpush1.msra.mxu0 0.0
    %58 = vmatprep.subr.mxu0 0.0
    %59 = vmatpush1.msra.mxu0 0.0
    %60 = vmatprep.subr.mxu0 0.0
    %61 = vmatpush1.msra.mxu0 0.0
    %62 = vmatprep.subr.mxu0 0.0
    %63 = vmatpush1.msra.mxu0 0.0
    %64 = vmatprep.subr.mxu0 0.0
    %65 = vmatpush1.msra.mxu0 0.0
    %66 = vmatprep.subr.mxu0 0.0
    %67 = vmatpush1.msra.mxu0 0.0
    %68 = vmatprep.subr.mxu0 0.0
    %69 = vmatpush1.msra.mxu0 0.0
    %70 = vmatprep.subr.mxu0 %v38
    %71 = vmatpush1.msra.mxu0 %v36
    %72 = vmatprep.subr.mxu0 0.0
    %73 = vmatpush2.msra.mxu0 0.0
    %74 = vmatprep.subr.mxu0 0.0
    %75 = vmatpush2.msra.mxu0 0.0
    %76 = vmatprep.subr.mxu0 0.0
    %77 = vmatpush2.msra.mxu0 0.0
    %78 = vmatprep.subr.mxu0 0.0
    %79 = vmatpush2.msra.mxu0 0.0
    %80 = vmatprep.subr.mxu0 0.0
    %81 = vmatpush2.msra.mxu0 0.0
    %82 = vmatprep.subr.mxu0 0.0
    %83 = vmatpush2.msra.mxu0 0.0
    %84 = vmatprep.subr.mxu0 0.0
    %85 = vmatpush2.msra.mxu0 0.0
    %86 = vmatprep.subr.mxu0 0.0
    %87 = vmatpush2.msra.mxu0 0.0
    %88 = vmatprep.subr.mxu0 0.0
    %89 = vmatpush2.msra.mxu0 0.0
    %90 = vmatprep.subr.mxu0 0.0
    %91 = vmatpush2.msra.mxu0 0.0
    %92 = vmatprep.subr.mxu0 0.0
    %93 = vmatpush2.msra.mxu0 0.0
    %94 = vmatprep.subr.mxu0 0.0
    %95 = vmatpush2.msra.mxu0 0.0
    %96 = vmatprep.subr.mxu0 0.0
    %97 = vmatpush2.msra.mxu0 0.0
    %98 = vmatprep.subr.mxu0 0.0
    %99 = vmatpush2.msra.mxu0 0.0
    %100 = vmatprep.subr.mxu0 0.0
    %101 = vmatpush2.msra.mxu0 0.0
    %102 = vmatprep.subr.mxu0 0.0
    %103 = vmatpush2.msra.mxu0 0.0
    %104 = vmatprep.mubr.f32.mxu0 0.0
    %105 = vmatmul.mubr.f32.gmra.mxu0 %v33
    %v106 = vpop.f32.mrf.mxu0
    %v107 = vadd.f32 %v27, %v106
    %v108 = vpop.f32.mrf.mxu0
    %v109 = vadd.f32 %v27, %v108
    %110 = vdwg.mxu0
    %v111 = vmax.f32 %v107, 0.0
    %v112 = vmax.f32 %v109, 0.0
    %v113 = vld [vmem:[%s3] sm:$0xf]
    %v114 = vld [vmem:[%s4] sm:$0xf]
    %116 = vset.pattern.permute.xlu0 0
    %117 = vperm.xlu0 %116, %v114
    %v118 = vpop.permute.xlu0 %117
    %vm120 = vcmask 64512
    %v122 = vsel %vm120, %v113, 0
    %124 = vmatprep.subr.mxu0 0.0
    %125 = vmatpush1.msra.mxu0 0.0
    %126 = vmatprep.subr.mxu0 0.0
    %127 = vmatpush1.msra.mxu0 0.0
    %128 = vmatprep.subr.mxu0 0.0
    %129 = vmatpush1.msra.mxu0 0.0
    %130 = vmatprep.subr.mxu0 0.0
    %131 = vmatpush1.msra.mxu0 0.0
    %132 = vmatprep.subr.mxu0 0.0
    %133 = vmatpush1.msra.mxu0 0.0
    %134 = vmatprep.subr.mxu0 0.0
    %135 = vmatpush1.msra.mxu0 0.0
    %136 = vmatprep.subr.mxu0 0.0
    %137 = vmatpush1.msra.mxu0 0.0
    %138 = vmatprep.subr.mxu0 0.0
    %139 = vmatpush1.msra.mxu0 0.0
    %140 = vmatprep.subr.mxu0 0.0
    %141 = vmatpush1.msra.mxu0 0.0
    %142 = vmatprep.subr.mxu0 0.0
    %143 = vmatpush1.msra.mxu0 0.0
    %144 = vmatprep.subr.mxu0 0.0
    %145 = vmatpush1.msra.mxu0 0.0
    %146 = vmatprep.subr.mxu0 0.0
    %147 = vmatpush1.msra.mxu0 0.0
    %148 = vmatprep.subr.mxu0 0.0
    %149 = vmatpush1.msra.mxu0 0.0
    %150 = vmatprep.subr.mxu0 0.0
    %151 = vmatpush1.msra.mxu0 0.0
    %152 = vmatprep.subr.mxu0 0.0
    %153 = vmatpush1.msra.mxu0 0.0
    %154 = vmatprep.subr.mxu0 %v112
    %155 = vmatpush1.msra.mxu0 %v111
    %156 = vmatprep.subr.mxu0 0.0
    %157 = vmatpush2.msra.mxu0 0.0
    %158 = vmatprep.subr.mxu0 0.0
    %159 = vmatpush2.msra.mxu0 0.0
    %160 = vmatprep.subr.mxu0 0.0
    %161 = vmatpush2.msra.mxu0 0.0
    %162 = vmatprep.subr.mxu0 0.0
    %163 = vmatpush2.msra.mxu0 0.0
    %164 = vmatprep.subr.mxu0 0.0
    %165 = vmatpush2.msra.mxu0 0.0
    %166 = vmatprep.subr.mxu0 0.0
    %167 = vmatpush2.msra.mxu0 0.0
    %168 = vmatprep.subr.mxu0 0.0
    %169 = vmatpush2.msra.mxu0 0.0
    %170 = vmatprep.subr.mxu0 0.0
    %171 = vmatpush2.msra.mxu0 0.0
    %172 = vmatprep.subr.mxu0 0.0
    %173 = vmatpush2.msra.mxu0 0.0
    %174 = vmatprep.subr.mxu0 0.0
    %175 = vmatpush2.msra.mxu0 0.0
    %176 = vmatprep.subr.mxu0 0.0
    %177 = vmatpush2.msra.mxu0 0.0
    %178 = vmatprep.subr.mxu0 0.0
    %179 = vmatpush2.msra.mxu0 0.0
    %180 = vmatprep.subr.mxu0 0.0
    %181 = vmatpush2.msra.mxu0 0.0
    %182 = vmatprep.subr.mxu0 0.0
    %183 = vmatpush2.msra.mxu0 0.0
    %184 = vmatprep.subr.mxu0 0.0
    %185 = vmatpush2.msra.mxu0 0.0
    %186 = vmatprep.subr.mxu0 0.0
    %187 = vmatpush2.msra.mxu0 0.0
    %188 = vmatprep.mubr.f32.mxu0 0.0
    %189 = vmatmul.mubr.f32.gmra.mxu0 %v122
    %v190 = vpop.f32.mrf.mxu0
    %v191 = vadd.f32 %v118, %v190
    %v192 = vpop.f32.mrf.mxu0
    %v193 = vadd.f32 %v118, %v192
    %194 = vdwg.mxu0
    %v195 = vxor.u32 %v191, 2147483648
    %v196 = vxor.u32 %v193, 2147483648
    %v197 = vmul.f32 %v195, 1.442695
    %v198 = vpow.pop %v197
    %v199 = vmul.f32 %v196, 1.442695
    %v200 = vpow.pop %v199
    %v201 = vadd.f32 %v198, 1.0
    %v202 = vadd.f32 %v200, 1.0
    %v203 = vrcp.pop %v201
    %v204 = vmul.f32 1.0, %v203
    %v205 = vrcp.pop %v202
    %v206 = vmul.f32 1.0, %v205
    %v209 = vcombine.low %v204, %v206
    %211 = vst [vmem:[#allocation2] sm:$0xff] %v209
    %s212 = scalar_lea.vmem %s0, 8
    %v213 = vld [vmem:[%s212] sm:$0xff]
    %v214 = vld [vmem:[%s1] sm:$0xff]
    %v215 = vld [vmem:[%s2] sm:$0xff]
    %217 = vset.pattern.permute.xlu0 0
    %218 = vperm.xlu0 %217, %v215
    %v219 = vpop.permute.xlu0 %218
    %v222 = vcombine.high %v213, %v213
    %v224 = vsel %vm31, %v214, 0
    %v226 = vsel %vm35, %v213, 0
    %v228 = vsel %vm35, %v222, 0
    %230 = vmatprep.subr.mxu0 0.0
    %231 = vmatpush1.msra.mxu0 0.0
    %232 = vmatprep.subr.mxu0 0.0
    %233 = vmatpush1.msra.mxu0 0.0
    %234 = vmatprep.subr.mxu0 0.0
    %235 = vmatpush1.msra.mxu0 0.0
    %236 = vmatprep.subr.mxu0 0.0
    %237 = vmatpush1.msra.mxu0 0.0
    %238 = vmatprep.subr.mxu0 0.0
    %239 = vmatpush1.msra.mxu0 0.0
    %240 = vmatprep.subr.mxu0 0.0
    %241 = vmatpush1.msra.mxu0 0.0
    %242 = vmatprep.subr.mxu0 0.0
    %243 = vmatpush1.msra.mxu0 0.0
    %244 = vmatprep.subr.mxu0 0.0
    %245 = vmatpush1.msra.mxu0 0.0
    %246 = vmatprep.subr.mxu0 0.0
    %247 = vmatpush1.msra.mxu0 0.0
    %248 = vmatprep.subr.mxu0 0.0
    %249 = vmatpush1.msra.mxu0 0.0
    %250 = vmatprep.subr.mxu0 0.0
    %251 = vmatpush1.msra.mxu0 0.0
    %252 = vmatprep.subr.mxu0 0.0
    %253 = vmatpush1.msra.mxu0 0.0
    %254 = vmatprep.subr.mxu0 0.0
    %255 = vmatpush1.msra.mxu0 0.0
    %256 = vmatprep.subr.mxu0 0.0
    %257 = vmatpush1.msra.mxu0 0.0
    %258 = vmatprep.subr.mxu0 0.0
    %259 = vmatpush1.msra.mxu0 0.0
    %260 = vmatprep.subr.mxu0 %v228
    %261 = vmatpush1.msra.mxu0 %v226
    %262 = vmatprep.subr.mxu0 0.0
    %263 = vmatpush2.msra.mxu0 0.0
    %264 = vmatprep.subr.mxu0 0.0
    %265 = vmatpush2.msra.mxu0 0.0
    %266 = vmatprep.subr.mxu0 0.0
    %267 = vmatpush2.msra.mxu0 0.0
    %268 = vmatprep.subr.mxu0 0.0
    %269 = vmatpush2.msra.mxu0 0.0
    %270 = vmatprep.subr.mxu0 0.0
    %271 = vmatpush2.msra.mxu0 0.0
    %272 = vmatprep.subr.mxu0 0.0
    %273 = vmatpush2.msra.mxu0 0.0
    %274 = vmatprep.subr.mxu0 0.0
    %275 = vmatpush2.msra.mxu0 0.0
    %276 = vmatprep.subr.mxu0 0.0
    %277 = vmatpush2.msra.mxu0 0.0
    %278 = vmatprep.subr.mxu0 0.0
    %279 = vmatpush2.msra.mxu0 0.0
    %280 = vmatprep.subr.mxu0 0.0
    %281 = vmatpush2.msra.mxu0 0.0
    %282 = vmatprep.subr.mxu0 0.0
    %283 = vmatpush2.msra.mxu0 0.0
    %284 = vmatprep.subr.mxu0 0.0
    %285 = vmatpush2.msra.mxu0 0.0
    %286 = vmatprep.subr.mxu0 0.0
    %287 = vmatpush2.msra.mxu0 0.0
    %288 = vmatprep.subr.mxu0 0.0
    %289 = vmatpush2.msra.mxu0 0.0
    %290 = vmatprep.subr.mxu0 0.0
    %291 = vmatpush2.msra.mxu0 0.0
    %292 = vmatprep.subr.mxu0 0.0
    %293 = vmatpush2.msra.mxu0 0.0
    %294 = vmatprep.mubr.f32.mxu0 0.0
    %295 = vmatmul.mubr.f32.gmra.mxu0 %v224
    %v296 = vpop.f32.mrf.mxu0
    %v297 = vadd.f32 %v219, %v296
    %v298 = vpop.f32.mrf.mxu0
    %v299 = vadd.f32 %v219, %v298
    %300 = vdwg.mxu0
    %v301 = vmax.f32 %v297, 0.0
    %v302 = vmax.f32 %v299, 0.0
    %v303 = vld [vmem:[%s3] sm:$0xf]
    %v304 = vld [vmem:[%s4] sm:$0xf]
    %306 = vset.pattern.permute.xlu0 0
    %307 = vperm.xlu0 %306, %v304
    %v308 = vpop.permute.xlu0 %307
    %v311 = vsel %vm120, %v303, 0
    %313 = vmatprep.subr.mxu0 0.0
    %314 = vmatpush1.msra.mxu0 0.0
    %315 = vmatprep.subr.mxu0 0.0
    %316 = vmatpush1.msra.mxu0 0.0
    %317 = vmatprep.subr.mxu0 0.0
    %318 = vmatpush1.msra.mxu0 0.0
    %319 = vmatprep.subr.mxu0 0.0
    %320 = vmatpush1.msra.mxu0 0.0
    %321 = vmatprep.subr.mxu0 0.0
    %322 = vmatpush1.msra.mxu0 0.0
    %323 = vmatprep.subr.mxu0 0.0
    %324 = vmatpush1.msra.mxu0 0.0
    %325 = vmatprep.subr.mxu0 0.0
    %326 = vmatpush1.msra.mxu0 0.0
    %327 = vmatprep.subr.mxu0 0.0
    %328 = vmatpush1.msra.mxu0 0.0
    %329 = vmatprep.subr.mxu0 0.0
    %330 = vmatpush1.msra.mxu0 0.0
    %331 = vmatprep.subr.mxu0 0.0
    %332 = vmatpush1.msra.mxu0 0.0
    %333 = vmatprep.subr.mxu0 0.0
    %334 = vmatpush1.msra.mxu0 0.0
    %335 = vmatprep.subr.mxu0 0.0
    %336 = vmatpush1.msra.mxu0 0.0
    %337 = vmatprep.subr.mxu0 0.0
    %338 = vmatpush1.msra.mxu0 0.0
    %339 = vmatprep.subr.mxu0 0.0
    %340 = vmatpush1.msra.mxu0 0.0
    %341 = vmatprep.subr.mxu0 0.0
    %342 = vmatpush1.msra.mxu0 0.0
    %343 = vmatprep.subr.mxu0 %v302
    %344 = vmatpush1.msra.mxu0 %v301
    %345 = vmatprep.subr.mxu0 0.0
    %346 = vmatpush2.msra.mxu0 0.0
    %347 = vmatprep.subr.mxu0 0.0
    %348 = vmatpush2.msra.mxu0 0.0
    %349 = vmatprep.subr.mxu0 0.0
    %350 = vmatpush2.msra.mxu0 0.0
    %351 = vmatprep.subr.mxu0 0.0
    %352 = vmatpush2.msra.mxu0 0.0
    %353 = vmatprep.subr.mxu0 0.0
    %354 = vmatpush2.msra.mxu0 0.0
    %355 = vmatprep.subr.mxu0 0.0
    %356 = vmatpush2.msra.mxu0 0.0
    %357 = vmatprep.subr.mxu0 0.0
    %358 = vmatpush2.msra.mxu0 0.0
    %359 = vmatprep.subr.mxu0 0.0
    %360 = vmatpush2.msra.mxu0 0.0
    %361 = vmatprep.subr.mxu0 0.0
    %362 = vmatpush2.msra.mxu0 0.0
    %363 = vmatprep.subr.mxu0 0.0
    %364 = vmatpush2.msra.mxu0 0.0
    %365 = vmatprep.subr.mxu0 0.0
    %366 = vmatpush2.msra.mxu0 0.0
    %367 = vmatprep.subr.mxu0 0.0
    %368 = vmatpush2.msra.mxu0 0.0
    %369 = vmatprep.subr.mxu0 0.0
    %370 = vmatpush2.msra.mxu0 0.0
    %371 = vmatprep.subr.mxu0 0.0
    %372 = vmatpush2.msra.mxu0 0.0
    %373 = vmatprep.subr.mxu0 0.0
    %374 = vmatpush2.msra.mxu0 0.0
    %375 = vmatprep.subr.mxu0 0.0
    %376 = vmatpush2.msra.mxu0 0.0
    %377 = vmatprep.mubr.f32.mxu0 0.0
    %378 = vmatmul.mubr.f32.gmra.mxu0 %v311
    %v379 = vpop.f32.mrf.mxu0
    %v380 = vadd.f32 %v308, %v379
    %v381 = vpop.f32.mrf.mxu0
    %v382 = vadd.f32 %v308, %v381
    %383 = vdwg.mxu0
    %v384 = vxor.u32 %v380, 2147483648
    %v385 = vxor.u32 %v382, 2147483648
    %v386 = vmul.f32 %v384, 1.442695
    %v387 = vpow.pop %v386
    %v388 = vmul.f32 %v385, 1.442695
    %v389 = vpow.pop %v388
    %v390 = vadd.f32 %v387, 1.0
    %v391 = vadd.f32 %v389, 1.0
    %v392 = vrcp.pop %v390
    %v393 = vmul.f32 1.0, %v392
    %v394 = vrcp.pop %v391
    %v395 = vmul.f32 1.0, %v394
    %v398 = vcombine.low %v393, %v395
    %s400 = scalar_lea.vmem [#allocation2], 8
    %401 = vst [vmem:[%s400] sm:$0xff] %v398
    // Predicated region
    $region22: #{tpu_custom_call.1} parent=1 // pred_check
      _
    $region23: #{tpu_custom_call.1} parent=1 // pred_check_branch
      %403 = sbr.rel (0) target = $region25
    $region24: #{tpu_custom_call.1} parent=1 // pred_region
      %s405 = ssub.s32 256, 256
      %406 = vsyncadd [#allocation3], %s405
      %s407 = sshll.u32 [#allocation2], 4
      %s408 = int_to_ptr.vmem [resolvable:$true] %s407
      %413 = dma.vmem_to_hbm [thread:$0]  %s408, 256, %s5, [#allocation3], 128, 128, 8
    $region25: #{tpu_custom_call.1} parent=1 // pred_fallthru
      _
    // Predicated region
    $region26: #{tpu_custom_call.1} parent=1 // pred_check
      _
    $region27: #{tpu_custom_call.1} parent=1 // pred_check_branch
      %415 = sbr.rel (0) target = $region29
    $region28: #{tpu_custom_call.1} parent=1 // pred_region
      %416 = dma.done [#allocation3], 256
    $region29: #{tpu_custom_call.1} parent=1 // pred_fallthru
      _
    %417 = vsyncpa [#allocation3], 1

</llo_original>
